<compile_context>
chip_gen: v7x
topology: tpu7x:2x2x1
jax: 0.10.0
libtpu: 0.0.40
codegen_flags: <defaults>
</compile_context>

<pallas_src>
import functools

import jax
import jax.numpy as jnp
from jax import lax
from jax.experimental import pallas as pl
from jax.experimental.pallas import tpu as pltpu


# ---------------------------------------------------------------------------
# Kernels
# ---------------------------------------------------------------------------

def _sdpa_attn_kernel(q_ref, k_ref, v_ref, o_ref, attn_ref, *, inv_temp, mm_dtype):
    """Full-attention variant: one (b, h, q-tile) step; K/V resident at full S."""
    # Fold 1/temperature into the small (TQ, D) side — softmax is invariant to
    # where the scale is applied; saves a (TQ, S) VPU multiply per tile.
    q = q_ref[...] * inv_temp
    k = k_ref[...]
    v = v_ref[...]
    if mm_dtype is not None:
        q = q.astype(mm_dtype)
        k = k.astype(mm_dtype)
        v = v.astype(mm_dtype)

    # scores = (q / temperature) @ k^T, contracting on D directly (no explicit
    # k.T / XLU transpose), f32 accumulation on the MXU.
    scores = lax.dot_general(
        q, k, dimension_numbers=(((1,), (1,)), ((), ())),
        preferred_element_type=jnp.float32)

    # Numerically-stable softmax along the last axis, all in f32.
    m = jnp.max(scores, axis=-1, keepdims=True)
    e = jnp.exp(scores - m)
    denom = jnp.sum(e, axis=-1, keepdims=True)
    inv = pl.reciprocal(denom, approx=True)      # EUP slot, nearly free after exp
    inv = inv * (2.0 - denom * inv)              # one Newton step -> full f32 accuracy
    attn = e * inv

    attn_ref[...] = attn.astype(attn_ref.dtype)

    # output = attn @ v; cast p to v's dtype so the second matmul also runs the
    # fast MXU path, accumulate in f32.
    out = lax.dot_general(
        attn.astype(v.dtype), v,
        dimension_numbers=(((1,), (0,)), ((), ())),
        preferred_element_type=jnp.float32)
    o_ref[...] = out.astype(o_ref.dtype)


def _sdpa_flash_kernel(q_ref, k_ref, v_ref, o_ref, m_sc, l_sc, acc_sc, *,
                       inv_temp, mm_dtype):
    """Output-only variant: online softmax over K/V tiles (last grid axis)."""
    kv = pl.program_id(3)

    @pl.when(kv == 0)
    def _():
        m_sc[...] = jnp.full_like(m_sc, -jnp.inf)
        l_sc[...] = jnp.zeros_like(l_sc)
        acc_sc[...] = jnp.zeros_like(acc_sc)

    q = q_ref[...] * inv_temp
    k = k_ref[...]
    v = v_ref[...]
    if mm_dtype is not None:
        q = q.astype(mm_dtype)
        k = k.astype(mm_dtype)
        v = v.astype(mm_dtype)

    s = lax.dot_general(
        q, k, dimension_numbers=(((1,), (1,)), ((), ())),
        preferred_element_type=jnp.float32)

    m_prev = m_sc[...]
    m_new = jnp.maximum(m_prev, jnp.max(s, axis=-1, keepdims=True))
    alpha = jnp.exp(m_prev - m_new)
    p = jnp.exp(s - m_new)                         # unnormalized probabilities

    l_sc[...] = alpha * l_sc[...] + jnp.sum(p, axis=-1, keepdims=True)
    acc_sc[...] = alpha * acc_sc[...] + lax.dot_general(
        p.astype(v.dtype), v, dimension_numbers=(((1,), (0,)), ((), ())),
        preferred_element_type=jnp.float32)
    m_sc[...] = m_new

    @pl.when(kv == pl.num_programs(3) - 1)
    def _():
        # Normalize the small (TQ, D) accumulator once, instead of the (TQ, S)
        # probability matrix every step.
        l = l_sc[...]
        inv = pl.reciprocal(l, approx=True)
        inv = inv * (2.0 - l * inv)
        o_ref[...] = (acc_sc[...] * inv).astype(o_ref.dtype)


# ---------------------------------------------------------------------------
# Wrapper
# ---------------------------------------------------------------------------

def _pick_block(seq_len, target, dtype):
    """Largest tile <= target that divides seq_len, respecting sublane packing."""
    align = 16 if jnp.dtype(dtype).itemsize < 4 else 8
    if seq_len <= target:
        return seq_len
    t = target
    while t >= align:
        if seq_len % t == 0 and t % align == 0:
            return t
        t //= 2
    return seq_len


def _vmem_budget_bytes():
    """~75% of the physical VMEM of the target chip (generation-aware)."""
    try:
        cap = int(getattr(pltpu.get_tpu_info(), "vmem_capacity_bytes"))
    except Exception:
        cap = 64 * 1024 * 1024   # assume the smallest current chip (v7x) if unknown
    return (cap * 3) // 4


def _attn_per_step_bytes(tq, s, d, itemsize):
    """Per-grid-step VMEM working set for the full-attention kernel."""
    io = 2 * itemsize * (tq * d + 2 * s * d + tq * d)   # q, k, v, out (double-buffered)
    io += 2 * itemsize * tq * s                         # attn output block (x2)
    temps = 3 * tq * s * 4                              # scores / e / attn in f32
    temps += 2 * tq * s * itemsize                      # cast temporaries
    temps += 2 * tq * d * 4                             # output accumulator temps
    return io + temps + (2 << 20)                       # Mosaic internal scratch headroom


def scaled_dot_product_attention(q, k, v, temperature, *,
                                 return_attn=True, block_q=256, block_k=512,
                                 cast_matmul_to_bf16=False):
    """q, k, v: (B, H, S, D) arrays.  Returns (output, attn) or just output."""
    B, H, S, D = q.shape
    itemsize = jnp.dtype(q.dtype).itemsize
    inv_temp = 1.0 / float(temperature)
    mm_dtype = jnp.bfloat16 if (cast_matmul_to_bf16 and q.dtype == jnp.float32) else None
    budget = _vmem_budget_bytes()

    if return_attn:
        # ---- module-parity path: attn (B,H,S,S) is materialized ----
        TQ = _pick_block(S, block_q, q.dtype)
        # Shrink the q tile until the per-step working set fits the VMEM budget.
        while TQ >= 16 and TQ % 16 == 0 and _attn_per_step_bytes(TQ, S, D, itemsize) > budget:
            TQ //= 2
        per_step = _attn_per_step_bytes(TQ, S, D, itemsize)
        vmem_limit = min(max(int(per_step * 1.25), 32 * 1024 * 1024), budget)

        kernel = functools.partial(_sdpa_attn_kernel, inv_temp=inv_temp, mm_dtype=mm_dtype)
        cost = pl.CostEstimate(
            flops=4 * B * H * S * S * D,
            transcendentals=B * H * S * S,
            bytes_accessed=itemsize * (4 * B * H * S * D + B * H * S * S))

        out, attn = pl.pallas_call(
            kernel,
            out_shape=(jax.ShapeDtypeStruct((B, H, S, D), q.dtype),
                       jax.ShapeDtypeStruct((B, H, S, S), q.dtype)),
            grid=(B, H, S // TQ),
            in_specs=[pl.BlockSpec((None, None, TQ, D), lambda b, h, i: (b, h, i, 0)),
                      pl.BlockSpec((None, None, S, D), lambda b, h, i: (b, h, 0, 0)),
                      pl.BlockSpec((None, None, S, D), lambda b, h, i: (b, h, 0, 0))],
            out_specs=(pl.BlockSpec((None, None, TQ, D), lambda b, h, i: (b, h, i, 0)),
                       pl.BlockSpec((None, None, TQ, S), lambda b, h, i: (b, h, i, 0))),
            compiler_params=pltpu.CompilerParams(
                # Megacore sharding only on B/H so both v7x cores never DMA the
                # same head's full-S K/V block; the q-tile axis stays serial.
                dimension_semantics=("parallel", "parallel", "arbitrary"),
                vmem_limit_bytes=vmem_limit),
            cost_estimate=cost,
        )(q, k, v)
        return out, attn

    # ---- output-only fast path: flash-style online softmax, K/V tiled on S ----
    TQ = _pick_block(S, block_q, q.dtype)
    TK = _pick_block(S, block_k, q.dtype)
    per_step = (2 * itemsize * (2 * TQ * D + 2 * TK * D)   # q/out + k/v blocks (x2)
                + 3 * TQ * TK * 4                           # s / p f32 temporaries
                + TQ * D * 4 + 4 * TQ * 4                   # acc + m/l scratch
                + (2 << 20))
    vmem_limit = min(max(int(per_step * 1.5), 32 * 1024 * 1024), budget)

    kernel = functools.partial(_sdpa_flash_kernel, inv_temp=inv_temp, mm_dtype=mm_dtype)
    cost = pl.CostEstimate(
        flops=4 * B * H * S * S * D,
        transcendentals=B * H * S * S,
        bytes_accessed=itemsize * 4 * B * H * S * D)

    out = pl.pallas_call(
        kernel,
        out_shape=jax.ShapeDtypeStruct((B, H, S, D), q.dtype),
        grid=(B, H, S // TQ, S // TK),
        in_specs=[pl.BlockSpec((None, None, TQ, D), lambda b, h, i, j: (b, h, i, 0)),
                  pl.BlockSpec((None, None, TK, D), lambda b, h, i, j: (b, h, j, 0)),
                  pl.BlockSpec((None, None, TK, D), lambda b, h, i, j: (b, h, j, 0))],
        out_specs=pl.BlockSpec((None, None, TQ, D), lambda b, h, i, j: (b, h, i, 0)),
        scratch_shapes=[pltpu.VMEM((TQ, 1), jnp.float32),    # running max  m
                        pltpu.VMEM((TQ, 1), jnp.float32),    # running sum  l
                        pltpu.VMEM((TQ, D), jnp.float32)],   # f32 accumulator
        compiler_params=pltpu.CompilerParams(
            dimension_semantics=("parallel", "parallel", "arbitrary", "arbitrary"),
            vmem_limit_bytes=vmem_limit),
        cost_estimate=cost,
    )(q, k, v)
    return out


if __name__ == "__main__":
    # Small, deterministic example.  D = 128 keeps output stores lane-dense;
    # block_q = block_k = 64 forces 2 q-tiles and 2 kv-tiles so both tiled
    # index maps (and the online-softmax carry) are exercised.
    B, H, S, D = 2, 4, 128, 128
    key = jax.random.PRNGKey(0)
    kq, kk, kv = jax.random.split(key, 3)
    q = jax.random.normal(kq, (B, H, S, D), dtype=jnp.float32)
    k = jax.random.normal(kk, (B, H, S, D), dtype=jnp.float32)
    v = jax.random.normal(kv, (B, H, S, D), dtype=jnp.float32)
    temperature = D ** 0.5  # typical choice: sqrt(d_model)

    out, attn = scaled_dot_product_attention(q, k, v, temperature, block_q=64)
    out_only = scaled_dot_product_attention(q, k, v, temperature,
                                            return_attn=False, block_q=64, block_k=64)
    out_bf16, attn_bf16 = scaled_dot_product_attention(
        q, k, v, temperature, block_q=64, cast_matmul_to_bf16=True)
    jax.block_until_ready((out, attn, out_only, out_bf16, attn_bf16))

    # Reference in plain JAX (eval-mode dropout == identity, mask=None).
    scores_ref = jnp.einsum("bhsd,bhtd->bhst", q / temperature, k,
                            precision=lax.Precision.HIGHEST)
    attn_ref = jax.nn.softmax(scores_ref, axis=-1)
    out_ref = jnp.einsum("bhst,bhtd->bhsd", attn_ref, v,
                         precision=lax.Precision.HIGHEST)

    assert jnp.allclose(out, out_ref, atol=1e-5, rtol=1e-5)
    assert jnp.allclose(attn, attn_ref, atol=1e-5, rtol=1e-5)
    assert jnp.allclose(out_only, out_ref, atol=2e-5, rtol=2e-5)
    assert jnp.allclose(out_bf16, out_ref, atol=5e-2, rtol=5e-2)
    assert jnp.allclose(attn_bf16, attn_ref, atol=5e-2, rtol=5e-2)

    print("KERNEL_OK")
</pallas_src>

<mosaic_0001>
module attributes {stable_mosaic.version = 11 : i64} {
  func.func @_sdpa_attn_kernel(%arg0: i32, %arg1: i32, %arg2: i32, %arg3: memref<1x1x64x128xf32, #tpu.memory_space<vmem>>, %arg4: memref<1x1x128x128xf32, #tpu.memory_space<vmem>>, %arg5: memref<1x1x128x128xf32, #tpu.memory_space<vmem>>, %arg6: memref<1x1x64x128xf32, #tpu.memory_space<vmem>>, %arg7: memref<1x1x64x128xf32, #tpu.memory_space<vmem>>) attributes {dimension_semantics = [#tpu.dimension_semantics<parallel>, #tpu.dimension_semantics<parallel>, #tpu.dimension_semantics<arbitrary>], iteration_bounds = array<i64: 2, 4, 2>, scalar_prefetch = 0 : i64, scratch_operands = 0 : i64, tpu.core_type = #tpu.core_type<tc>, window_params = [{transform_indices = @transform_0, window_bounds = array<i64: 1, 1, 64, 128>}, {transform_indices = @transform_1, window_bounds = array<i64: 1, 1, 128, 128>}, {transform_indices = @transform_2, window_bounds = array<i64: 1, 1, 128, 128>}, {transform_indices = @transform_3, window_bounds = array<i64: 1, 1, 64, 128>}, {transform_indices = @transform_4, window_bounds = array<i64: 1, 1, 64, 128>}]} {
    %c0 = arith.constant 0 : index
    %c0_0 = arith.constant 0 : index
    %c0_1 = arith.constant 0 : index
    %c0_2 = arith.constant 0 : index
    %0 = vector.load %arg3[%c0, %c0_0, %c0_1, %c0_2] : memref<1x1x64x128xf32, #tpu.memory_space<vmem>>, vector<1x1x64x128xf32>
    %1 = vector.shape_cast %0 : vector<1x1x64x128xf32> to vector<64x128xf32>
    %cst = arith.constant 0.0883883461 : f32
    %2 = vector.broadcast %cst : f32 to vector<64x128xf32>
    %3 = arith.mulf %1, %2 : vector<64x128xf32>
    %c0_3 = arith.constant 0 : index
    %c0_4 = arith.constant 0 : index
    %c0_5 = arith.constant 0 : index
    %c0_6 = arith.constant 0 : index
    %4 = vector.load %arg4[%c0_3, %c0_4, %c0_5, %c0_6] : memref<1x1x128x128xf32, #tpu.memory_space<vmem>>, vector<1x1x128x128xf32>
    %5 = vector.shape_cast %4 : vector<1x1x128x128xf32> to vector<128x128xf32>
    %c0_7 = arith.constant 0 : index
    %c0_8 = arith.constant 0 : index
    %c0_9 = arith.constant 0 : index
    %c0_10 = arith.constant 0 : index
    %6 = vector.load %arg5[%c0_7, %c0_8, %c0_9, %c0_10] : memref<1x1x128x128xf32, #tpu.memory_space<vmem>>, vector<1x1x128x128xf32>
    %7 = vector.shape_cast %6 : vector<1x1x128x128xf32> to vector<128x128xf32>
    %cst_11 = arith.constant dense<0.000000e+00> : vector<64x128xf32>
    %8 = tpu.matmul %3, %5, %cst_11 {dimension_numbers = #tpu.dot_dimension_numbers<[1], [1], [0], [0], [0, 0, 1, 0], [], []>} : vector<64x128xf32>, vector<128x128xf32>, vector<64x128xf32> -> vector<64x128xf32>
    %cst_12 = arith.constant dense<0xFF800000> : vector<64xf32>
    %9 = vector.multi_reduction <maximumf>, %8, %cst_12 [1] : vector<64x128xf32> to vector<64xf32>
    %10 = vector.shape_cast %9 : vector<64xf32> to vector<64x1xf32>
    %11 = vector.broadcast %10 : vector<64x1xf32> to vector<64x128xf32>
    %12 = arith.subf %8, %11 : vector<64x128xf32>
    %13 = math.exp %12 : vector<64x128xf32>
    %cst_13 = arith.constant dense<0.000000e+00> : vector<64xf32>
    %14 = vector.multi_reduction <add>, %13, %cst_13 [1] : vector<64x128xf32> to vector<64xf32>
    %15 = vector.shape_cast %14 : vector<64xf32> to vector<64x1xf32>
    %16 = tpu.reciprocal %15 {approx = true} : vector<64x1xf32> -> vector<64x1xf32>
    %17 = arith.mulf %15, %16 : vector<64x1xf32>
    %cst_14 = arith.constant 2.000000e+00 : f32
    %18 = vector.broadcast %cst_14 : f32 to vector<64x1xf32>
    %19 = arith.subf %18, %17 : vector<64x1xf32>
    %20 = arith.mulf %16, %19 : vector<64x1xf32>
    %21 = vector.broadcast %20 : vector<64x1xf32> to vector<64x128xf32>
    %22 = arith.mulf %13, %21 : vector<64x128xf32>
    %c0_15 = arith.constant 0 : index
    %c0_16 = arith.constant 0 : index
    %c0_17 = arith.constant 0 : index
    %c0_18 = arith.constant 0 : index
    %23 = vector.load %arg7[%c0_15, %c0_16, %c0_17, %c0_18] : memref<1x1x64x128xf32, #tpu.memory_space<vmem>>, vector<1x1x64x128xf32>
    %24 = vector.shape_cast %23 : vector<1x1x64x128xf32> to vector<64x128xf32>
    %25 = vector.shape_cast %22 : vector<64x128xf32> to vector<1x1x64x128xf32>
    tpu.vector_store %arg7[%c0_15, %c0_16, %c0_17, %c0_18], %25 {strides = array<i32>} : memref<1x1x64x128xf32, #tpu.memory_space<vmem>>, vector<1x1x64x128xf32>,
    %cst_19 = arith.constant dense<0.000000e+00> : vector<64x128xf32>
    %26 = tpu.matmul %22, %7, %cst_19 {dimension_numbers = #tpu.dot_dimension_numbers<[1], [0], [0], [1], [0, 0, 1, 1], [], []>} : vector<64x128xf32>, vector<128x128xf32>, vector<64x128xf32> -> vector<64x128xf32>
    %c0_20 = arith.constant 0 : index
    %c0_21 = arith.constant 0 : index
    %c0_22 = arith.constant 0 : index
    %c0_23 = arith.constant 0 : index
    %27 = vector.load %arg6[%c0_20, %c0_21, %c0_22, %c0_23] : memref<1x1x64x128xf32, #tpu.memory_space<vmem>>, vector<1x1x64x128xf32>
    %28 = vector.shape_cast %27 : vector<1x1x64x128xf32> to vector<64x128xf32>
    %29 = vector.shape_cast %26 : vector<64x128xf32> to vector<1x1x64x128xf32>
    tpu.vector_store %arg6[%c0_20, %c0_21, %c0_22, %c0_23], %29 {strides = array<i32>} : memref<1x1x64x128xf32, #tpu.memory_space<vmem>>, vector<1x1x64x128xf32>,
    return
  }
  func.func @transform_0(%arg0: i32, %arg1: i32, %arg2: i32) -> (i32, i32, i32, i32) {
    %c0_i32 = arith.constant 0 : i32
    %c0_i32_0 = arith.constant 0 : i32
    return %arg0, %arg1, %arg2, %c0_i32 : i32, i32, i32, i32
  }
  func.func @transform_1(%arg0: i32, %arg1: i32, %arg2: i32) -> (i32, i32, i32, i32) {
    %c0_i32 = arith.constant 0 : i32
    %c0_i32_0 = arith.constant 0 : i32
    %c0_i32_1 = arith.constant 0 : i32
    return %arg0, %arg1, %c0_i32, %c0_i32_0 : i32, i32, i32, i32
  }
  func.func @transform_2(%arg0: i32, %arg1: i32, %arg2: i32) -> (i32, i32, i32, i32) {
    %c0_i32 = arith.constant 0 : i32
    %c0_i32_0 = arith.constant 0 : i32
    %c0_i32_1 = arith.constant 0 : i32
    return %arg0, %arg1, %c0_i32, %c0_i32_0 : i32, i32, i32, i32
  }
  func.func @transform_3(%arg0: i32, %arg1: i32, %arg2: i32) -> (i32, i32, i32, i32) {
    %c0_i32 = arith.constant 0 : i32
    %c0_i32_0 = arith.constant 0 : i32
    return %arg0, %arg1, %arg2, %c0_i32 : i32, i32, i32, i32
  }
  func.func @transform_4(%arg0: i32, %arg1: i32, %arg2: i32) -> (i32, i32, i32, i32) {
    %c0_i32 = arith.constant 0 : i32
    %c0_i32_0 = arith.constant 0 : i32
    return %arg0, %arg1, %arg2, %c0_i32 : i32, i32, i32, i32
  }
}

</mosaic_0001>

<llo_original>
// kernel: tpu_custom_call.1
$region0: #{tpu_custom_call.1}
  #allocation0 [shape = 'u32[]', space=smem, size = 0x4, offset = 0x4, fixed_abs, tag = 'smem constant byte address 0x4 - core index']
  #allocation1 [shape = 'u32[144,128]{1,0:T(1,128)}', space=vmem, size = 0x12000, scoped, tag = 'internal scratch']
  %s0 = inlined_call_operand.hbm [shape: f32[2,4,128,128], index: 0, kind: input, shape index: {}]
  %s1 = inlined_call_operand.hbm [shape: f32[2,4,128,128], index: 1, kind: input, shape index: {}]
  %s2 = inlined_call_operand.hbm [shape: f32[2,4,128,128], index: 2, kind: input, shape index: {}]
  %s3 = inlined_call_operand.hbm [shape: f32[2,4,128,128], index: 3, kind: output, shape index: {0}]
  %s4 = inlined_call_operand.hbm [shape: f32[2,4,128,128], index: 4, kind: output, shape index: {1}]
  %5 = xla_tuple %s3, %s4
  %s6 = sld [smem:[#allocation0]]
  $region65: #{tpu_custom_call.1} parent=0
    _
  %s8 = ssub.s32 1, %s6
  %s9 = scalar_select 0, %s8, %s6
  $region1: #{tpu_custom_call.1} parent=0
    #allocation2 [shape = 'u8[65536]{0}', space=vmem, size = 0x10000, scoped, tag = 'input window, operand 0']
    #allocation3 [shape = 's32[2]{0}', space=sflag, size = 0x8, scoped, tag = 'scoped memory for tpu_custom_call.1']
    #allocation4 [shape = 's32[2]{0}', space=sflag, size = 0x8, scoped, tag = 'scoped memory for tpu_custom_call.1']
    #allocation5 [shape = 'u8[131072]{0}', space=vmem, size = 0x20000, scoped, tag = 'input window, operand 1']
    #allocation6 [shape = 's32[2]{0}', space=sflag, size = 0x8, scoped, tag = 'scoped memory for tpu_custom_call.1']
    #allocation7 [shape = 'u8[131072]{0}', space=vmem, size = 0x20000, scoped, tag = 'input window, operand 2']
    #allocation8 [shape = 'u8[65536]{0}', space=vmem, size = 0x10000, scoped, tag = 'output window, operand 0']
    #allocation9 [shape = 'u8[65536]{0}', space=vmem, size = 0x10000, scoped, tag = 'output window, operand 1']
    #allocation10 [shape = 's32[2]{0}', space=sflag, size = 0x8, scoped, tag = 'scoped memory for tpu_custom_call.1']
    %10 = vsyncpa [#allocation3], 0
    %s11 = scalar_lea.sflag [#allocation3], 1
    %12 = vsyncpa %s11, 0
    %13 = vsyncpa [#allocation6], 0
    %s14 = scalar_lea.sflag [#allocation6], 1
    %15 = vsyncpa %s14, 0
    %16 = vsyncpa [#allocation4], 0
    %s17 = scalar_lea.sflag [#allocation4], 1
    %18 = vsyncpa %s17, 0
    %19 = vsyncpa [#allocation10], 0
    %s20 = scalar_lea.sflag [#allocation10], 1
    %21 = vsyncpa %s20, 0
    loop: start=0, step=1, limit=18
    $region2: #{tpu_custom_call.1} parent=1 // loop_pre_header
      _
    $region3: #{tpu_custom_call.1} parent=1 // loop_header
      %s23 = sphi 0, %s27
      %p24 = scmp.ge.s32.totalorder %s23, 18
      %s30 = sphi 0, %s49
      %s31 = sphi 0, %s45
      %s32 = sphi 0, %s41
      %s33 = sphi 0, %s30
      %s34 = sphi 0, %s31
      %s35 = sphi 0, %s32
      %s36 = sphi 0, %s33
      %s37 = sphi 0, %s34
      %s38 = sphi 0, %s35
      %s56 = sphi 0, %s58
      %s59 = sphi 0, %s56
      %s60 = sphi 0, %s59
      %s76 = sphi 0, %s60
      %s84 = sphi 0, %s86
      %s87 = sphi 0, %s84
      %s88 = sphi 0, %s87
      %s104 = sphi 0, %s88
      %s112 = sphi 0, %s114
      %s115 = sphi 0, %s112
      %s116 = sphi 0, %s115
      %s132 = sphi 0, %s116
      %s142 = sphi 0, %s144
      %s145 = sphi 0, %s142
      %s146 = sphi 0, %s145
      %s162 = sphi 0, %s146
      %s172 = sphi 0, %s174
      %s175 = sphi 0, %s172
      %s176 = sphi 0, %s175
      %s192 = sphi 0, %s176
    $region4: #{tpu_custom_call.1} parent=1 // loop_header_branch
      %26 = sbr.rel (%p24) target = $region8
    $region5: #{tpu_custom_call.1} parent=1 // loop_body
      %s28 = ssub.s32 %s23, 1
      %s29 = ssub.s32 %s23, 2
      %s39 = sadd.s32 1, %s32
      %p40 = scmp.ge.s32.totalorder %s39, 2
      %s41 = scalar_select %p40, 0, %s39
      %s42 = sadd.s32 1, %s31
      %s43 = scalar_select %p40, %s42, %s31
      %p44 = scmp.ge.s32.totalorder %s43, 4
      %s45 = scalar_select %p44, 0, %s43
      %s46 = sadd.s32 1, %s30
      %s47 = scalar_select %p44, %s46, %s30
      %p48 = scmp.ge.s32.totalorder %s47, 2
      %s49 = scalar_select %p48, 0, %s47
      %s50 = ssub.s32 %s30, %s49
      %s51 = ssub.s32 %s31, %s45
      %s52 = sor.u32 %s50, %s51
      %s53 = ssub.s32 %s32, %s41
      %s54 = sor.u32 %s52, %s53
      %p55 = scmp.eq.s32.totalorder %s54, 0
      %s57 = sadd.s32 %s56, 1
      %s58 = scalar_select %p55, %s56, %s57
      %p61 = pneg %p55
      %p62 = scmp.eq.s32.totalorder %s23, 15
      %p63 = por %p61, %p62
      %p64 = scmp.ne.s32.totalorder %s56, %s59
      %p65 = scmp.eq.s32.totalorder %s23, 0
      %p66 = por %p64, %p65
      %p67 = scmp.ne.s32.totalorder %s56, %s59
      %p68 = scmp.eq.s32.totalorder %s28, 15
      %p69 = por %p67, %p68
      %p70 = scmp.ne.s32.totalorder %s59, %s60
      %p71 = scmp.eq.s32.totalorder %s28, 0
      %p72 = por %p70, %p71
      %p73 = scmp.ne.s32.totalorder %s59, %s60
      %p74 = scmp.eq.s32.totalorder %s29, 15
      %p75 = por %p73, %p74
      %p77 = scmp.ne.s32.totalorder %s60, %s76
      %p78 = scmp.eq.s32.totalorder %s29, 0
      %p79 = por %p77, %p78
      %s80 = ssub.s32 %s30, %s49
      %s81 = ssub.s32 %s31, %s45
      %s82 = sor.u32 %s80, %s81
      %p83 = scmp.eq.s32.totalorder %s82, 0
      %s85 = sadd.s32 %s84, 1
      %s86 = scalar_select %p83, %s84, %s85
      %p89 = pneg %p83
      %p90 = scmp.eq.s32.totalorder %s23, 15
      %p91 = por %p89, %p90
      %p92 = scmp.ne.s32.totalorder %s84, %s87
      %p93 = scmp.eq.s32.totalorder %s23, 0
      %p94 = por %p92, %p93
      %p95 = scmp.ne.s32.totalorder %s84, %s87
      %p96 = scmp.eq.s32.totalorder %s28, 15
      %p97 = por %p95, %p96
      %p98 = scmp.ne.s32.totalorder %s87, %s88
      %p99 = scmp.eq.s32.totalorder %s28, 0
      %p100 = por %p98, %p99
      %p101 = scmp.ne.s32.totalorder %s87, %s88
      %p102 = scmp.eq.s32.totalorder %s29, 15
      %p103 = por %p101, %p102
      %p105 = scmp.ne.s32.totalorder %s88, %s104
      %p106 = scmp.eq.s32.totalorder %s29, 0
      %p107 = por %p105, %p106
      %s108 = ssub.s32 %s30, %s49
      %s109 = ssub.s32 %s31, %s45
      %s110 = sor.u32 %s108, %s109
      %p111 = scmp.eq.s32.totalorder %s110, 0
      %s113 = sadd.s32 %s112, 1
      %s114 = scalar_select %p111, %s112, %s113
      %p117 = pneg %p111
      %p118 = scmp.eq.s32.totalorder %s23, 15
      %p119 = por %p117, %p118
      %p120 = scmp.ne.s32.totalorder %s112, %s115
      %p121 = scmp.eq.s32.totalorder %s23, 0
      %p122 = por %p120, %p121
      %p123 = scmp.ne.s32.totalorder %s112, %s115
      %p124 = scmp.eq.s32.totalorder %s28, 15
      %p125 = por %p123, %p124
      %p126 = scmp.ne.s32.totalorder %s115, %s116
      %p127 = scmp.eq.s32.totalorder %s28, 0
      %p128 = por %p126, %p127
      %p129 = scmp.ne.s32.totalorder %s115, %s116
      %p130 = scmp.eq.s32.totalorder %s29, 15
      %p131 = por %p129, %p130
      %p133 = scmp.ne.s32.totalorder %s116, %s132
      %p134 = scmp.eq.s32.totalorder %s29, 0
      %p135 = por %p133, %p134
      %s136 = ssub.s32 %s30, %s49
      %s137 = ssub.s32 %s31, %s45
      %s138 = sor.u32 %s136, %s137
      %s139 = ssub.s32 %s32, %s41
      %s140 = sor.u32 %s138, %s139
      %p141 = scmp.eq.s32.totalorder %s140, 0
      %s143 = sadd.s32 %s142, 1
      %s144 = scalar_select %p141, %s142, %s143
      %p147 = pneg %p141
      %p148 = scmp.eq.s32.totalorder %s23, 15
      %p149 = por %p147, %p148
      %p150 = scmp.ne.s32.totalorder %s142, %s145
      %p151 = scmp.eq.s32.totalorder %s23, 0
      %p152 = por %p150, %p151
      %p153 = scmp.ne.s32.totalorder %s142, %s145
      %p154 = scmp.eq.s32.totalorder %s28, 15
      %p155 = por %p153, %p154
      %p156 = scmp.ne.s32.totalorder %s145, %s146
      %p157 = scmp.eq.s32.totalorder %s28, 0
      %p158 = por %p156, %p157
      %p159 = scmp.ne.s32.totalorder %s145, %s146
      %p160 = scmp.eq.s32.totalorder %s29, 15
      %p161 = por %p159, %p160
      %p163 = scmp.ne.s32.totalorder %s146, %s162
      %p164 = scmp.eq.s32.totalorder %s29, 0
      %p165 = por %p163, %p164
      %s166 = ssub.s32 %s30, %s49
      %s167 = ssub.s32 %s31, %s45
      %s168 = sor.u32 %s166, %s167
      %s169 = ssub.s32 %s32, %s41
      %s170 = sor.u32 %s168, %s169
      %p171 = scmp.eq.s32.totalorder %s170, 0
      %s173 = sadd.s32 %s172, 1
      %s174 = scalar_select %p171, %s172, %s173
      %p177 = pneg %p171
      %p178 = scmp.eq.s32.totalorder %s23, 15
      %p179 = por %p177, %p178
      %p180 = scmp.ne.s32.totalorder %s172, %s175
      %p181 = scmp.eq.s32.totalorder %s23, 0
      %p182 = por %p180, %p181
      %p183 = scmp.ne.s32.totalorder %s172, %s175
      %p184 = scmp.eq.s32.totalorder %s28, 15
      %p185 = por %p183, %p184
      %p186 = scmp.ne.s32.totalorder %s175, %s176
      %p187 = scmp.eq.s32.totalorder %s28, 0
      %p188 = por %p186, %p187
      %p189 = scmp.ne.s32.totalorder %s175, %s176
      %p190 = scmp.eq.s32.totalorder %s29, 15
      %p191 = por %p189, %p190
      %p193 = scmp.ne.s32.totalorder %s176, %s192
      %p194 = scmp.eq.s32.totalorder %s29, 0
      %p195 = por %p193, %p194
      %p196 = scmp.le.s32.totalorder 1, %s23
      %p197 = scmp.lt.s32.totalorder %s23, 17
      %p198 = pnand %p196, %p197
      %p199 = pneg %p198
      // Predicated region
      $region9: #{tpu_custom_call.1} parent=5 // pred_check
        _
      $region10: #{tpu_custom_call.1} parent=5 // pred_check_branch
        %201 = sbr.rel (%p198) target = $region12
      $region11: #{tpu_custom_call.1} parent=5 // pred_region
        %s202 = ssub.s32 %s23, 1
      $region12: #{tpu_custom_call.1} parent=5 // pred_fallthru
        _
      %p203 = scmp.lt.s32.totalorder %s23, 16
      // Predicated region
      $region13: #{tpu_custom_call.1} parent=5 // pred_check
        %p204 = pneg %p203
      $region14: #{tpu_custom_call.1} parent=5 // pred_check_branch
        %206 = sbr.rel (%p204) target = $region16
      $region15: #{tpu_custom_call.1} parent=5 // pred_region
        // Predicated region
        $region17: #{tpu_custom_call.1} parent=15 // pred_check
          %p207 = pneg %p66
        $region18: #{tpu_custom_call.1} parent=15 // pred_check_branch
          %209 = sbr.rel (%p207) target = $region20
        $region19: #{tpu_custom_call.1} parent=15 // pred_region
          %s210 = sand.u32 %s56, 1
          %s211 = scalar_lea.sflag [#allocation3], %s210
          %s212 = sand.u32 %s56, 1
          %s213 = smul.addr %s212, 64
          %s214 = scalar_lea.vmem [#allocation2], %s213
          %s215 = smul.u32 8, %s32
          %s217 = ssub.s32 1024, 1024
          %218 = vsyncadd %s211, %s217
          %s219 = smul.addr %s31, 16
          %s220 = sadd.s32 %s215, %s219
          %s221 = smul.addr %s30, 64
          %s222 = sadd.s32 %s220, %s221
          %s223 = smul.addr %s222, 128
          %s224 = scalar_lea.hbm %s0, %s223
          %s225 = sshll.u32 %s214, 4
          %s226 = int_to_ptr.vmem [resolvable:$true] %s225
          %231 = dma.hbm_to_vmem [thread:$0]  %s224, 1024, %s226, %s211, 128, 128, 8
        $region20: #{tpu_custom_call.1} parent=15 // pred_fallthru
          _
        // Predicated region
        $region21: #{tpu_custom_call.1} parent=15 // pred_check
          %p232 = pneg %p94
        $region22: #{tpu_custom_call.1} parent=15 // pred_check_branch
          %234 = sbr.rel (%p232) target = $region24
        $region23: #{tpu_custom_call.1} parent=15 // pred_region
          %s235 = sand.u32 %s23, 1
          %s236 = scalar_lea.sflag [#allocation6], %s235
          %s237 = sand.u32 %s84, 1
          %s238 = smul.addr %s237, 128
          %s239 = scalar_lea.vmem [#allocation5], %s238
          %s241 = ssub.s32 2048, 2048
          %242 = vsyncadd %s236, %s241
          %s243 = smul.addr %s31, 16
          %s244 = smul.addr %s30, 64
          %s245 = sadd.s32 %s243, %s244
          %s246 = smul.addr %s245, 128
          %s247 = scalar_lea.hbm %s1, %s246
          %s248 = sshll.u32 %s239, 4
          %s249 = int_to_ptr.vmem [resolvable:$true] %s248
          %254 = dma.hbm_to_vmem [thread:$0]  %s247, 2048, %s249, %s236, 128, 128, 8
        $region24: #{tpu_custom_call.1} parent=15 // pred_fallthru
          _
        // Predicated region
        $region25: #{tpu_custom_call.1} parent=15 // pred_check
          %p255 = pneg %p122
        $region26: #{tpu_custom_call.1} parent=15 // pred_check_branch
          %257 = sbr.rel (%p255) target = $region28
        $region27: #{tpu_custom_call.1} parent=15 // pred_region
          %s258 = sand.u32 %s23, 1
          %s259 = scalar_lea.sflag [#allocation6], %s258
          %s260 = sand.u32 %s112, 1
          %s261 = smul.addr %s260, 128
          %s262 = scalar_lea.vmem [#allocation7], %s261
          %s264 = ssub.s32 2048, 2048
          %265 = vsyncadd %s259, %s264
          %s266 = smul.addr %s31, 16
          %s267 = smul.addr %s30, 64
          %s268 = sadd.s32 %s266, %s267
          %s269 = smul.addr %s268, 128
          %s270 = scalar_lea.hbm %s2, %s269
          %s271 = sshll.u32 %s262, 4
          %s272 = int_to_ptr.vmem [resolvable:$true] %s271
          %277 = dma.hbm_to_vmem [thread:$0]  %s270, 2048, %s272, %s259, 128, 128, 8
        $region28: #{tpu_custom_call.1} parent=15 // pred_fallthru
          _
      $region16: #{tpu_custom_call.1} parent=5 // pred_fallthru
        _
      %p278 = scmp.le.s32.totalorder 1, %s23
      %p279 = scmp.lt.s32.totalorder %s23, 17
      %p280 = pnand %p278, %p279
      %p281 = pneg %p280
      // Predicated region
      $region29: #{tpu_custom_call.1} parent=5 // pred_check
        _
      $region30: #{tpu_custom_call.1} parent=5 // pred_check_branch
        %283 = sbr.rel (%p280) target = $region32
      $region31: #{tpu_custom_call.1} parent=5 // pred_region
        %s284 = ssub.s32 %s23, 1
        %s285 = sand.u32 %s59, 1
        %s286 = scalar_lea.sflag [#allocation3], %s285
        %s287 = sand.u32 %s59, 1
        %s288 = smul.addr %s287, 64
        %s289 = scalar_lea.vmem [#allocation2], %s288
        // Predicated region
        $region33: #{tpu_custom_call.1} parent=31 // pred_check
          %p290 = pneg %p72
        $region34: #{tpu_custom_call.1} parent=31 // pred_check_branch
          %292 = sbr.rel (%p290) target = $region36
        $region35: #{tpu_custom_call.1} parent=31 // pred_region
          %293 = dma.done %s286, 1024
        $region36: #{tpu_custom_call.1} parent=31 // pred_fallthru
          _
        %s294 = sand.u32 %s28, 1
        %s295 = scalar_lea.sflag [#allocation6], %s294
        %s296 = sand.u32 %s87, 1
        %s297 = smul.addr %s296, 128
        %s298 = scalar_lea.vmem [#allocation5], %s297
        // Predicated region
        $region37: #{tpu_custom_call.1} parent=31 // pred_check
          %p299 = pneg %p100
        $region38: #{tpu_custom_call.1} parent=31 // pred_check_branch
          %301 = sbr.rel (%p299) target = $region40
        $region39: #{tpu_custom_call.1} parent=31 // pred_region
          %302 = dma.done %s295, 2048
        $region40: #{tpu_custom_call.1} parent=31 // pred_fallthru
          _
        %s303 = sand.u32 %s28, 1
        %s304 = scalar_lea.sflag [#allocation6], %s303
        %s305 = sand.u32 %s115, 1
        %s306 = smul.addr %s305, 128
        %s307 = scalar_lea.vmem [#allocation7], %s306
        // Predicated region
        $region41: #{tpu_custom_call.1} parent=31 // pred_check
          %p308 = pneg %p128
        $region42: #{tpu_custom_call.1} parent=31 // pred_check_branch
          %310 = sbr.rel (%p308) target = $region44
        $region43: #{tpu_custom_call.1} parent=31 // pred_region
          %311 = dma.done %s304, 2048
        $region44: #{tpu_custom_call.1} parent=31 // pred_fallthru
          _
        %s312 = sand.u32 %s59, 1
        %s313 = scalar_lea.sflag [#allocation3], %s312
        %s314 = sand.u32 %s59, 1
        %s315 = smul.addr %s314, 64
        %s316 = scalar_lea.vmem [#allocation2], %s315
        %p317 = pneg %p72
        %p318 = pneg %p69
        %s319 = sand.u32 %s28, 1
        %s320 = scalar_lea.sflag [#allocation6], %s319
        %s321 = sand.u32 %s87, 1
        %s322 = smul.addr %s321, 128
        %s323 = scalar_lea.vmem [#allocation5], %s322
        %p324 = pneg %p100
        %p325 = pneg %p97
        %s326 = sand.u32 %s28, 1
        %s327 = scalar_lea.sflag [#allocation6], %s326
        %s328 = sand.u32 %s115, 1
        %s329 = smul.addr %s328, 128
        %s330 = scalar_lea.vmem [#allocation7], %s329
        %p331 = pneg %p128
        %p332 = pneg %p125
        %p333 = pneg %p158
        %p334 = pneg %p155
        %s335 = sand.u32 %s145, 1
        %s336 = scalar_lea.sflag [#allocation4], %s335
        %s337 = sand.u32 %s145, 1
        %s338 = smul.addr %s337, 64
        %s339 = scalar_lea.vmem [#allocation8], %s338
        %p340 = pneg %p188
        %p341 = pneg %p185
        %s342 = sand.u32 %s175, 1
        %s343 = scalar_lea.sflag [#allocation10], %s342
        %s344 = sand.u32 %s175, 1
        %s345 = smul.addr %s344, 64
        %s346 = scalar_lea.vmem [#allocation9], %s345
        %s347 = smul.u32 8, %s35
        %s348 = smul.u32 8, %s35
        %s349 = smul.u32 8, %s35
        %v350 = vld [vmem:[%s289] sm:$0xff]
        %v351 = vld [vmem:[%s289 + $0x8] sm:$0xff]
        %v352 = vld [vmem:[%s289 + $0x10] sm:$0xff]
        %v353 = vld [vmem:[%s289 + $0x18] sm:$0xff]
        %v354 = vld [vmem:[%s289 + $0x20] sm:$0xff]
        %v355 = vld [vmem:[%s289 + $0x28] sm:$0xff]
        %v356 = vld [vmem:[%s289 + $0x30] sm:$0xff]
        %v357 = vld [vmem:[%s289 + $0x38] sm:$0xff]
        %v358 = vmul.f32 %v350, 0.088388346
        %v359 = vmul.f32 %v351, 0.088388346
        %v360 = vmul.f32 %v352, 0.088388346
        %v361 = vmul.f32 %v353, 0.088388346
        %v362 = vmul.f32 %v354, 0.088388346
        %v363 = vmul.f32 %v355, 0.088388346
        %v364 = vmul.f32 %v356, 0.088388346
        %v365 = vmul.f32 %v357, 0.088388346
        %v366 = vld [vmem:[%s298] sm:$0xff]
        %v367 = vld [vmem:[%s298 + $0x8] sm:$0xff]
        %v368 = vld [vmem:[%s298 + $0x10] sm:$0xff]
        %v369 = vld [vmem:[%s298 + $0x18] sm:$0xff]
        %v370 = vld [vmem:[%s298 + $0x20] sm:$0xff]
        %v371 = vld [vmem:[%s298 + $0x28] sm:$0xff]
        %v372 = vld [vmem:[%s298 + $0x30] sm:$0xff]
        %v373 = vld [vmem:[%s298 + $0x38] sm:$0xff]
        %v374 = vld [vmem:[%s298 + $0x40] sm:$0xff]
        %v375 = vld [vmem:[%s298 + $0x48] sm:$0xff]
        %v376 = vld [vmem:[%s298 + $0x50] sm:$0xff]
        %v377 = vld [vmem:[%s298 + $0x58] sm:$0xff]
        %v378 = vld [vmem:[%s298 + $0x60] sm:$0xff]
        %v379 = vld [vmem:[%s298 + $0x68] sm:$0xff]
        %v380 = vld [vmem:[%s298 + $0x70] sm:$0xff]
        %v381 = vld [vmem:[%s298 + $0x78] sm:$0xff]
        %v382 = vld [vmem:[%s307] sm:$0xff]
        %v383 = vld [vmem:[%s307 + $0x8] sm:$0xff]
        %v384 = vld [vmem:[%s307 + $0x10] sm:$0xff]
        %v385 = vld [vmem:[%s307 + $0x18] sm:$0xff]
        %v386 = vld [vmem:[%s307 + $0x20] sm:$0xff]
        %v387 = vld [vmem:[%s307 + $0x28] sm:$0xff]
        %v388 = vld [vmem:[%s307 + $0x30] sm:$0xff]
        %v389 = vld [vmem:[%s307 + $0x38] sm:$0xff]
        %v390 = vld [vmem:[%s307 + $0x40] sm:$0xff]
        %v391 = vld [vmem:[%s307 + $0x48] sm:$0xff]
        %v392 = vld [vmem:[%s307 + $0x50] sm:$0xff]
        %v393 = vld [vmem:[%s307 + $0x58] sm:$0xff]
        %v394 = vld [vmem:[%s307 + $0x60] sm:$0xff]
        %v395 = vld [vmem:[%s307 + $0x68] sm:$0xff]
        %v396 = vld [vmem:[%s307 + $0x70] sm:$0xff]
        %v397 = vld [vmem:[%s307 + $0x78] sm:$0xff]
        %398 = vmatprep.subr.mxu0 0.0
        %399 = vmatpush1.xpose.msra.mxu0 %v366
        %400 = vmatprep.subr.mxu0 0.0
        %401 = vmatpush1.xpose.msra.mxu0 %v367
        %402 = vmatprep.subr.mxu0 0.0
        %403 = vmatpush1.xpose.msra.mxu0 %v368
        %404 = vmatprep.subr.mxu0 0.0
        %405 = vmatpush1.xpose.msra.mxu0 %v369
        %406 = vmatprep.subr.mxu0 0.0
        %407 = vmatpush1.xpose.msra.mxu0 %v370
        %408 = vmatprep.subr.mxu0 0.0
        %409 = vmatpush1.xpose.msra.mxu0 %v371
        %410 = vmatprep.subr.mxu0 0.0
        %411 = vmatpush1.xpose.msra.mxu0 %v372
        %412 = vmatprep.subr.mxu0 0.0
        %413 = vmatpush1.xpose.msra.mxu0 %v373
        %414 = vmatprep.subr.mxu0 0.0
        %415 = vmatpush1.xpose.msra.mxu0 %v374
        %416 = vmatprep.subr.mxu0 0.0
        %417 = vmatpush1.xpose.msra.mxu0 %v375
        %418 = vmatprep.subr.mxu0 0.0
        %419 = vmatpush1.xpose.msra.mxu0 %v376
        %420 = vmatprep.subr.mxu0 0.0
        %421 = vmatpush1.xpose.msra.mxu0 %v377
        %422 = vmatprep.subr.mxu0 0.0
        %423 = vmatpush1.xpose.msra.mxu0 %v378
        %424 = vmatprep.subr.mxu0 0.0
        %425 = vmatpush1.xpose.msra.mxu0 %v379
        %426 = vmatprep.subr.mxu0 0.0
        %427 = vmatpush1.xpose.msra.mxu0 %v380
        %428 = vmatprep.subr.mxu0 0.0
        %429 = vmatpush1.xpose.msra.mxu0 %v381
        %430 = vmatprep.subr.mxu0 0.0
        %431 = vmatpush1.xpose.msra.mxu0 0.0
        %432 = vmatprep.subr.mxu0 0.0
        %433 = vmatpush1.xpose.msra.mxu0 0.0
        %434 = vmatprep.subr.mxu0 0.0
        %435 = vmatpush1.xpose.msra.mxu0 0.0
        %436 = vmatprep.subr.mxu0 0.0
        %437 = vmatpush1.xpose.msra.mxu0 0.0
        %438 = vmatprep.subr.mxu0 0.0
        %439 = vmatpush1.xpose.msra.mxu0 0.0
        %440 = vmatprep.subr.mxu0 0.0
        %441 = vmatpush1.xpose.msra.mxu0 0.0
        %442 = vmatprep.subr.mxu0 0.0
        %443 = vmatpush1.xpose.msra.mxu0 0.0
        %444 = vmatprep.subr.mxu0 0.0
        %445 = vmatpush1.xpose.msra.mxu0 0.0
        %446 = vmatprep.subr.mxu0 0.0
        %447 = vmatpush1.xpose.msra.mxu0 0.0
        %448 = vmatprep.subr.mxu0 0.0
        %449 = vmatpush1.xpose.msra.mxu0 0.0
        %450 = vmatprep.subr.mxu0 0.0
        %451 = vmatpush1.xpose.msra.mxu0 0.0
        %452 = vmatprep.subr.mxu0 0.0
        %453 = vmatpush1.xpose.msra.mxu0 0.0
        %454 = vmatprep.subr.mxu0 0.0
        %455 = vmatpush1.xpose.msra.mxu0 0.0
        %456 = vmatprep.subr.mxu0 0.0
        %457 = vmatpush1.xpose.msra.mxu0 0.0
        %458 = vmatprep.subr.mxu0 0.0
        %459 = vmatpush1.xpose.msra.mxu0 0.0
        %460 = vmatprep.subr.mxu0 0.0
        %461 = vmatpush1.xpose.msra.mxu0 0.0
        %462 = vmatprep.mubr.f32.mxu0 0.0
        %463 = vmatmul.mubr.f32.gmra.mrb[0].mxu0 %v358
        %v464 = vpop.f32.mrb[0].mxu0
        %v465 = vadd.f32 0.0, %v464
        %v466 = vpop.f32.mrb[0].mxu0
        %467 = vmatprep.mubr.f32.mxu0 0.0
        %468 = vmatmul.mubr.f32.gmra.mrb[0].mxu0 %v359
        %v469 = vpop.f32.mrb[0].mxu0
        %v470 = vadd.f32 0.0, %v469
        %v471 = vpop.f32.mrb[0].mxu0
        %472 = vmatprep.mubr.f32.mxu0 0.0
        %473 = vmatmul.mubr.f32.gmra.mrb[0].mxu0 %v360
        %v474 = vpop.f32.mrb[0].mxu0
        %v475 = vadd.f32 0.0, %v474
        %v476 = vpop.f32.mrb[0].mxu0
        %477 = vmatprep.mubr.f32.mxu0 0.0
        %478 = vmatmul.mubr.f32.gmra.mrb[0].mxu0 %v361
        %v479 = vpop.f32.mrb[0].mxu0
        %v480 = vadd.f32 0.0, %v479
        %v481 = vpop.f32.mrb[0].mxu0
        %482 = vmatprep.mubr.f32.mxu0 0.0
        %483 = vmatmul.mubr.f32.gmra.mrb[0].mxu0 %v362
        %v484 = vpop.f32.mrb[0].mxu0
        %v485 = vadd.f32 0.0, %v484
        %v486 = vpop.f32.mrb[0].mxu0
        %487 = vmatprep.mubr.f32.mxu0 0.0
        %488 = vmatmul.mubr.f32.gmra.mrb[0].mxu0 %v363
        %v489 = vpop.f32.mrb[0].mxu0
        %v490 = vadd.f32 0.0, %v489
        %v491 = vpop.f32.mrb[0].mxu0
        %492 = vmatprep.mubr.f32.mxu0 0.0
        %493 = vmatmul.mubr.f32.gmra.mrb[0].mxu0 %v364
        %v494 = vpop.f32.mrb[0].mxu0
        %v495 = vadd.f32 0.0, %v494
        %v496 = vpop.f32.mrb[0].mxu0
        %497 = vmatprep.mubr.f32.mxu0 0.0
        %498 = vmatmul.mubr.f32.gmra.mrb[0].mxu0 %v365
        %v499 = vpop.f32.mrb[0].mxu0
        %v500 = vadd.f32 0.0, %v499
        %v501 = vpop.f32.mrb[0].mxu0
        %502 = vdwg.mxu0
        %503 = vmax.xlane.f32.xlu0 %v465
        %v504 = vpop.xlane.xlu0 %503
        %505 = vmax.xlane.f32.xlu0 %v470
        %v506 = vpop.xlane.xlu0 %505
        %507 = vmax.xlane.f32.xlu0 %v475
        %v508 = vpop.xlane.xlu0 %507
        %509 = vmax.xlane.f32.xlu0 %v480
        %v510 = vpop.xlane.xlu0 %509
        %511 = vmax.xlane.f32.xlu0 %v485
        %v512 = vpop.xlane.xlu0 %511
        %513 = vmax.xlane.f32.xlu0 %v490
        %v514 = vpop.xlane.xlu0 %513
        %515 = vmax.xlane.f32.xlu0 %v495
        %v516 = vpop.xlane.xlu0 %515
        %517 = vmax.xlane.f32.xlu0 %v500
        %v518 = vpop.xlane.xlu0 %517
        %v519 = vsub.f32 %v465, %v504
        %v520 = vsub.f32 %v470, %v506
        %v521 = vsub.f32 %v475, %v508
        %v522 = vsub.f32 %v480, %v510
        %v523 = vsub.f32 %v485, %v512
        %v524 = vsub.f32 %v490, %v514
        %v525 = vsub.f32 %v495, %v516
        %v526 = vsub.f32 %v500, %v518
        %v527 = vmul.f32 %v519, 1.442695
        %v528 = vpow.pop %v527
        %v529 = vmul.f32 %v520, 1.442695
        %v530 = vpow.pop %v529
        %v531 = vmul.f32 %v521, 1.442695
        %v532 = vpow.pop %v531
        %v533 = vmul.f32 %v522, 1.442695
        %v534 = vpow.pop %v533
        %v535 = vmul.f32 %v523, 1.442695
        %v536 = vpow.pop %v535
        %v537 = vmul.f32 %v524, 1.442695
        %v538 = vpow.pop %v537
        %v539 = vmul.f32 %v525, 1.442695
        %v540 = vpow.pop %v539
        %v541 = vmul.f32 %v526, 1.442695
        %v542 = vpow.pop %v541
        %543 = vadd.xlane.f32.xlu0 %v528
        %v544 = vpop.xlane.xlu0 %543
        %545 = vadd.xlane.f32.xlu0 %v530
        %v546 = vpop.xlane.xlu0 %545
        %547 = vadd.xlane.f32.xlu0 %v532
        %v548 = vpop.xlane.xlu0 %547
        %549 = vadd.xlane.f32.xlu0 %v534
        %v550 = vpop.xlane.xlu0 %549
        %551 = vadd.xlane.f32.xlu0 %v536
        %v552 = vpop.xlane.xlu0 %551
        %553 = vadd.xlane.f32.xlu0 %v538
        %v554 = vpop.xlane.xlu0 %553
        %555 = vadd.xlane.f32.xlu0 %v540
        %v556 = vpop.xlane.xlu0 %555
        %557 = vadd.xlane.f32.xlu0 %v542
        %v558 = vpop.xlane.xlu0 %557
        %v559 = vrcp.pop %v544
        %v560 = vrcp.pop %v546
        %v561 = vrcp.pop %v548
        %v562 = vrcp.pop %v550
        %v563 = vrcp.pop %v552
        %v564 = vrcp.pop %v554
        %v565 = vrcp.pop %v556
        %v566 = vrcp.pop %v558
        %v567 = vmul.f32 %v544, %v559
        %v568 = vmul.f32 %v546, %v560
        %v569 = vmul.f32 %v548, %v561
        %v570 = vmul.f32 %v550, %v562
        %v571 = vmul.f32 %v552, %v563
        %v572 = vmul.f32 %v554, %v564
        %v573 = vmul.f32 %v556, %v565
        %v574 = vmul.f32 %v558, %v566
        %v575 = vsub.f32 2.0, %v567
        %v576 = vsub.f32 2.0, %v568
        %v577 = vsub.f32 2.0, %v569
        %v578 = vsub.f32 2.0, %v570
        %v579 = vsub.f32 2.0, %v571
        %v580 = vsub.f32 2.0, %v572
        %v581 = vsub.f32 2.0, %v573
        %v582 = vsub.f32 2.0, %v574
        %v583 = vmul.f32 %v559, %v575
        %v584 = vmul.f32 %v560, %v576
        %v585 = vmul.f32 %v561, %v577
        %v586 = vmul.f32 %v562, %v578
        %v587 = vmul.f32 %v563, %v579
        %v588 = vmul.f32 %v564, %v580
        %v589 = vmul.f32 %v565, %v581
        %v590 = vmul.f32 %v566, %v582
        %v591 = vmul.f32 %v528, %v583
        %v592 = vmul.f32 %v530, %v584
        %v593 = vmul.f32 %v532, %v585
        %v594 = vmul.f32 %v534, %v586
        %v595 = vmul.f32 %v536, %v587
        %v596 = vmul.f32 %v538, %v588
        %v597 = vmul.f32 %v540, %v589
        %v598 = vmul.f32 %v542, %v590
        %599 = vst [vmem:[%s346] sm:$0xff] %v591
        %600 = vst [vmem:[%s346 + $0x8] sm:$0xff] %v592
        %601 = vst [vmem:[%s346 + $0x10] sm:$0xff] %v593
        %602 = vst [vmem:[%s346 + $0x18] sm:$0xff] %v594
        %603 = vst [vmem:[%s346 + $0x20] sm:$0xff] %v595
        %604 = vst [vmem:[%s346 + $0x28] sm:$0xff] %v596
        %605 = vst [vmem:[%s346 + $0x30] sm:$0xff] %v597
        %606 = vst [vmem:[%s346 + $0x38] sm:$0xff] %v598
        %607 = vmatprep.subr.mxu0 0.0
        %608 = vmatpush1.msra.mxu0 %v382
        %609 = vmatprep.subr.mxu0 0.0
        %610 = vmatpush1.msra.mxu0 %v383
        %611 = vmatprep.subr.mxu0 0.0
        %612 = vmatpush1.msra.mxu0 %v384
        %613 = vmatprep.subr.mxu0 0.0
        %614 = vmatpush1.msra.mxu0 %v385
        %615 = vmatprep.subr.mxu0 0.0
        %616 = vmatpush1.msra.mxu0 %v386
        %617 = vmatprep.subr.mxu0 0.0
        %618 = vmatpush1.msra.mxu0 %v387
        %619 = vmatprep.subr.mxu0 0.0
        %620 = vmatpush1.msra.mxu0 %v388
        %621 = vmatprep.subr.mxu0 0.0
        %622 = vmatpush1.msra.mxu0 %v389
        %623 = vmatprep.subr.mxu0 0.0
        %624 = vmatpush1.msra.mxu0 %v390
        %625 = vmatprep.subr.mxu0 0.0
        %626 = vmatpush1.msra.mxu0 %v391
        %627 = vmatprep.subr.mxu0 0.0
        %628 = vmatpush1.msra.mxu0 %v392
        %629 = vmatprep.subr.mxu0 0.0
        %630 = vmatpush1.msra.mxu0 %v393
        %631 = vmatprep.subr.mxu0 0.0
        %632 = vmatpush1.msra.mxu0 %v394
        %633 = vmatprep.subr.mxu0 0.0
        %634 = vmatpush1.msra.mxu0 %v395
        %635 = vmatprep.subr.mxu0 0.0
        %636 = vmatpush1.msra.mxu0 %v396
        %637 = vmatprep.subr.mxu0 0.0
        %638 = vmatpush1.msra.mxu0 %v397
        %639 = vmatprep.subr.mxu0 0.0
        %640 = vmatpush1.msra.mxu0 0.0
        %641 = vmatprep.subr.mxu0 0.0
        %642 = vmatpush1.msra.mxu0 0.0
        %643 = vmatprep.subr.mxu0 0.0
        %644 = vmatpush1.msra.mxu0 0.0
        %645 = vmatprep.subr.mxu0 0.0
        %646 = vmatpush1.msra.mxu0 0.0
        %647 = vmatprep.subr.mxu0 0.0
        %648 = vmatpush1.msra.mxu0 0.0
        %649 = vmatprep.subr.mxu0 0.0
        %650 = vmatpush1.msra.mxu0 0.0
        %651 = vmatprep.subr.mxu0 0.0
        %652 = vmatpush1.msra.mxu0 0.0
        %653 = vmatprep.subr.mxu0 0.0
        %654 = vmatpush1.msra.mxu0 0.0
        %655 = vmatprep.subr.mxu0 0.0
        %656 = vmatpush1.msra.mxu0 0.0
        %657 = vmatprep.subr.mxu0 0.0
        %658 = vmatpush1.msra.mxu0 0.0
        %659 = vmatprep.subr.mxu0 0.0
        %660 = vmatpush1.msra.mxu0 0.0
        %661 = vmatprep.subr.mxu0 0.0
        %662 = vmatpush1.msra.mxu0 0.0
        %663 = vmatprep.subr.mxu0 0.0
        %664 = vmatpush1.msra.mxu0 0.0
        %665 = vmatprep.subr.mxu0 0.0
        %666 = vmatpush1.msra.mxu0 0.0
        %667 = vmatprep.subr.mxu0 0.0
        %668 = vmatpush1.msra.mxu0 0.0
        %669 = vmatprep.subr.mxu0 0.0
        %670 = vmatpush1.msra.mxu0 0.0
        %671 = vmatprep.mubr.f32.mxu0 0.0
        %672 = vmatmul.mubr.f32.gmra.mrb[0].mxu0 %v591
        %v673 = vpop.f32.mrb[0].mxu0
        %v674 = vadd.f32 0.0, %v673
        %v675 = vpop.f32.mrb[0].mxu0
        %676 = vmatprep.mubr.f32.mxu0 0.0
        %677 = vmatmul.mubr.f32.gmra.mrb[0].mxu0 %v592
        %v678 = vpop.f32.mrb[0].mxu0
        %v679 = vadd.f32 0.0, %v678
        %v680 = vpop.f32.mrb[0].mxu0
        %681 = vmatprep.mubr.f32.mxu0 0.0
        %682 = vmatmul.mubr.f32.gmra.mrb[0].mxu0 %v593
        %v683 = vpop.f32.mrb[0].mxu0
        %v684 = vadd.f32 0.0, %v683
        %v685 = vpop.f32.mrb[0].mxu0
        %686 = vmatprep.mubr.f32.mxu0 0.0
        %687 = vmatmul.mubr.f32.gmra.mrb[0].mxu0 %v594
        %v688 = vpop.f32.mrb[0].mxu0
        %v689 = vadd.f32 0.0, %v688
        %v690 = vpop.f32.mrb[0].mxu0
        %691 = vmatprep.mubr.f32.mxu0 0.0
        %692 = vmatmul.mubr.f32.gmra.mrb[0].mxu0 %v595
        %v693 = vpop.f32.mrb[0].mxu0
        %v694 = vadd.f32 0.0, %v693
        %v695 = vpop.f32.mrb[0].mxu0
        %696 = vmatprep.mubr.f32.mxu0 0.0
        %697 = vmatmul.mubr.f32.gmra.mrb[0].mxu0 %v596
        %v698 = vpop.f32.mrb[0].mxu0
        %v699 = vadd.f32 0.0, %v698
        %v700 = vpop.f32.mrb[0].mxu0
        %701 = vmatprep.mubr.f32.mxu0 0.0
        %702 = vmatmul.mubr.f32.gmra.mrb[0].mxu0 %v597
        %v703 = vpop.f32.mrb[0].mxu0
        %v704 = vadd.f32 0.0, %v703
        %v705 = vpop.f32.mrb[0].mxu0
        %706 = vmatprep.mubr.f32.mxu0 0.0
        %707 = vmatmul.mubr.f32.gmra.mrb[0].mxu0 %v598
        %v708 = vpop.f32.mrb[0].mxu0
        %v709 = vadd.f32 0.0, %v708
        %v710 = vpop.f32.mrb[0].mxu0
        %711 = vdwg.mxu0
        %712 = vst [vmem:[%s339] sm:$0xff] %v674
        %713 = vst [vmem:[%s339 + $0x8] sm:$0xff] %v679
        %714 = vst [vmem:[%s339 + $0x10] sm:$0xff] %v684
        %715 = vst [vmem:[%s339 + $0x18] sm:$0xff] %v689
        %716 = vst [vmem:[%s339 + $0x20] sm:$0xff] %v694
        %717 = vst [vmem:[%s339 + $0x28] sm:$0xff] %v699
        %718 = vst [vmem:[%s339 + $0x30] sm:$0xff] %v704
        %719 = vst [vmem:[%s339 + $0x38] sm:$0xff] %v709
        %s720 = sand.u32 %s145, 1
        %s721 = scalar_lea.sflag [#allocation4], %s720
        %s722 = sand.u32 %s145, 1
        %s723 = smul.addr %s722, 64
        %s724 = scalar_lea.vmem [#allocation8], %s723
        %s725 = sand.u32 %s175, 1
        %s726 = scalar_lea.sflag [#allocation10], %s725
        %s727 = sand.u32 %s175, 1
        %s728 = smul.addr %s727, 64
        %s729 = scalar_lea.vmem [#allocation9], %s728
        // Predicated region
        $region45: #{tpu_custom_call.1} parent=31 // pred_check
          %p730 = pneg %p155
        $region46: #{tpu_custom_call.1} parent=31 // pred_check_branch
          %732 = sbr.rel (%p730) target = $region48
        $region47: #{tpu_custom_call.1} parent=31 // pred_region
          %s733 = smul.u32 8, %s35
          %s735 = ssub.s32 1024, 1024
          %736 = vsyncadd %s721, %s735
          %s737 = smul.addr %s34, 16
          %s738 = sadd.s32 %s733, %s737
          %s739 = smul.addr %s33, 64
          %s740 = sadd.s32 %s738, %s739
          %s741 = smul.addr %s740, 128
          %s742 = scalar_lea.hbm %s3, %s741
          %s743 = sshll.u32 %s724, 4
          %s744 = int_to_ptr.vmem [resolvable:$true] %s743
          %749 = dma.vmem_to_hbm [thread:$0]  %s744, 1024, %s742, %s721, 128, 128, 8
        $region48: #{tpu_custom_call.1} parent=31 // pred_fallthru
          _
        // Predicated region
        $region49: #{tpu_custom_call.1} parent=31 // pred_check
          %p750 = pneg %p185
        $region50: #{tpu_custom_call.1} parent=31 // pred_check_branch
          %752 = sbr.rel (%p750) target = $region52
        $region51: #{tpu_custom_call.1} parent=31 // pred_region
          %s753 = smul.u32 8, %s35
          %s755 = ssub.s32 1024, 1024
          %756 = vsyncadd %s726, %s755
          %s757 = smul.addr %s34, 16
          %s758 = sadd.s32 %s753, %s757
          %s759 = smul.addr %s33, 64
          %s760 = sadd.s32 %s758, %s759
          %s761 = smul.addr %s760, 128
          %s762 = scalar_lea.hbm %s4, %s761
          %s763 = sshll.u32 %s729, 4
          %s764 = int_to_ptr.vmem [resolvable:$true] %s763
          %769 = dma.vmem_to_hbm [thread:$0]  %s764, 1024, %s762, %s726, 128, 128, 8
        $region52: #{tpu_custom_call.1} parent=31 // pred_fallthru
          _
      $region32: #{tpu_custom_call.1} parent=5 // pred_fallthru
        _
      %p770 = scmp.le.s32.totalorder 2, %s23
      // Predicated region
      $region53: #{tpu_custom_call.1} parent=5 // pred_check
        %p771 = pneg %p770
      $region54: #{tpu_custom_call.1} parent=5 // pred_check_branch
        %773 = sbr.rel (%p771) target = $region56
      $region55: #{tpu_custom_call.1} parent=5 // pred_region
        %s774 = ssub.s32 %s23, 2
        // Predicated region
        $region57: #{tpu_custom_call.1} parent=55 // pred_check
          %p775 = pneg %p161
        $region58: #{tpu_custom_call.1} parent=55 // pred_check_branch
          %777 = sbr.rel (%p775) target = $region60
        $region59: #{tpu_custom_call.1} parent=55 // pred_region
          %s778 = sand.u32 %s146, 1
          %s779 = scalar_lea.sflag [#allocation4], %s778
          %s780 = sand.u32 %s146, 1
          %s781 = smul.addr %s780, 64
          %s782 = scalar_lea.vmem [#allocation8], %s781
          %783 = dma.done %s779, 1024
        $region60: #{tpu_custom_call.1} parent=55 // pred_fallthru
          _
        // Predicated region
        $region61: #{tpu_custom_call.1} parent=55 // pred_check
          %p784 = pneg %p191
        $region62: #{tpu_custom_call.1} parent=55 // pred_check_branch
          %786 = sbr.rel (%p784) target = $region64
        $region63: #{tpu_custom_call.1} parent=55 // pred_region
          %s787 = sand.u32 %s176, 1
          %s788 = scalar_lea.sflag [#allocation10], %s787
          %s789 = sand.u32 %s176, 1
          %s790 = smul.addr %s789, 64
          %s791 = scalar_lea.vmem [#allocation9], %s790
          %792 = dma.done %s788, 1024
        $region64: #{tpu_custom_call.1} parent=55 // pred_fallthru
          _
      $region56: #{tpu_custom_call.1} parent=5 // pred_fallthru
        _
    $region6: #{tpu_custom_call.1} parent=1 // loop_footer
      %s27 = sadd.s32 1, %s23
    $region7: #{tpu_custom_call.1} parent=1 // loop_footer_branch
      %22 = sbr.rel target = $region3
    $region8: #{tpu_custom_call.1} parent=1 // loop_exit
      _
    %793 = vsyncpa [#allocation3], 1
    %s794 = scalar_lea.sflag [#allocation3], 1
    %795 = vsyncpa %s794, 1
    %796 = vsyncpa [#allocation6], 1
    %s797 = scalar_lea.sflag [#allocation6], 1
    %798 = vsyncpa %s797, 1
    %799 = vsyncpa [#allocation4], 1
    %s800 = scalar_lea.sflag [#allocation4], 1
    %801 = vsyncpa %s800, 1
    %802 = vsyncpa [#allocation10], 1
    %s803 = scalar_lea.sflag [#allocation10], 1
    %804 = vsyncpa %s803, 1

</llo_original>
